<compile_context>
chip_gen: v7x
topology: tpu7x:2x2x1
jax: 0.10.0
libtpu: 0.0.40
codegen_flags: <defaults>
</compile_context>

<pallas_src>
import jax
import jax.numpy as jnp
from jax.experimental import pallas as pl
from jax.experimental.pallas import tpu as pltpu

PACK = 4                 # logical rows packed per vreg row (fills K=128)
MAX_BLOCK_ROWS = 1024    # packed rows per grid block (VMEM-safe on all gens)


def _cdiv(a, b):
    return -(-a // b)


def _event_fc_kernel(x_ref, w_ref, b_ref, od_ref, os_ref):
    # x_ref: (block_m, PACK*H)         packed input rows
    # w_ref: (PACK*H, 2*PACK*H)        [kron(I4,W_d.T) | kron(I4,W_s.T)]
    # b_ref: (1, 2*PACK*H)             [tile(b_d,4) | tile(b_s,4)]
    # od_ref/os_ref: (block_m, PACK*H) lane-dense packed d / s outputs
    y = jnp.dot(x_ref[...], w_ref[...], preferred_element_type=jnp.float32)
    y = y + b_ref[...]
    half = od_ref.shape[1]
    od_ref[...] = y[:, :half].astype(od_ref.dtype)
    os_ref[...] = y[:, half:].astype(os_ref.dtype)


def prepare_event_fc_weights(w_d, b_d, w_s, b_s, pack=PACK):
    """One-time weight prep (do at parameter-load time, not every forward).

    w_d, w_s: (H, H) torch.nn.Linear layout (out, in); b_d, b_s: (H,).
    Returns:
      w_block: (pack*H, 2*pack*H)  = [kron(I,W_d.T) | kron(I,W_s.T)]
      b_block: (1, 2*pack*H)       = [tile(b_d,pack) | tile(b_s,pack)]
    """
    H = w_d.shape[0]
    eye = jnp.eye(pack, dtype=w_d.dtype)
    w_block_d = jnp.kron(eye, w_d.T)                       # (pack*H, pack*H)
    w_block_s = jnp.kron(eye, w_s.T)                       # (pack*H, pack*H)
    w_block = jnp.concatenate([w_block_d, w_block_s], axis=1)
    b_block = jnp.concatenate([jnp.tile(b_d, pack), jnp.tile(b_s, pack)])
    return w_block, b_block.reshape(1, 2 * pack * H)


def event_fc_forward(adj, last_output_ab, w_block, b_block, pack=PACK):
    """Pallas implementation of Event_FC.forward.

    adj is accepted for API parity but (as in the PyTorch module) unused.
    last_output_ab: (B, N, H) float32
    w_block, b_block: outputs of prepare_event_fc_weights.
    Returns (event_d_embedding, event_s_embedding), each (B, N, H).
    """
    del adj  # unused in the reference forward
    B, N, H = last_output_ab.shape
    Kp, Np = w_block.shape
    assert Kp == pack * H and Np == 2 * pack * H

    M = B * N
    # Pad only to the minimum that satisfies (8,128) after packing: 32 rows.
    row_mult = pack * 8
    M_pad = _cdiv(M, row_mult) * row_mult
    x2d = last_output_ab.reshape(M, H)
    if M_pad != M:
        x2d = jnp.pad(x2d, ((0, M_pad - M), (0, 0)))
    Mp = M_pad // pack                          # packed rows (multiple of 8)

    # Single block (grid_m = 1) whenever it fits; only split for large M.
    block_m = min(Mp, MAX_BLOCK_ROWS)
    grid_m = _cdiv(Mp, block_m)
    Mp_pad = grid_m * block_m
    if Mp_pad != Mp:
        x2d = jnp.pad(x2d, ((0, (Mp_pad - Mp) * pack), (0, 0)))
    x_packed = x2d.reshape(Mp_pad, Kp)          # 4 consecutive rows per packed row

    out_d, out_s = pl.pallas_call(
        _event_fc_kernel,
        out_shape=(
            jax.ShapeDtypeStruct((Mp_pad, Kp), last_output_ab.dtype),
            jax.ShapeDtypeStruct((Mp_pad, Kp), last_output_ab.dtype),
        ),
        grid=(grid_m,),
        in_specs=[
            pl.BlockSpec((block_m, Kp), lambda i: (i, 0)),
            pl.BlockSpec((Kp, Np), lambda i: (0, 0)),
            pl.BlockSpec((1, Np), lambda i: (0, 0)),
        ],
        out_specs=[
            pl.BlockSpec((block_m, Kp), lambda i: (i, 0)),
            pl.BlockSpec((block_m, Kp), lambda i: (i, 0)),
        ],
        compiler_params=pltpu.CompilerParams(
            dimension_semantics=("parallel",)),
    )(x_packed, w_block, b_block)

    # (Mp_pad, 128) -> (M_total_pad, 32) is a free reshape; slice off padding.
    event_d = out_d.reshape(Mp_pad * pack, H)[:M].reshape(B, N, H)
    event_s = out_s.reshape(Mp_pad * pack, H)[:M].reshape(B, N, H)
    return event_d, event_s


def _init_linear_params(key, fan_in, fan_out, dtype=jnp.float32):
    # Deterministic init mimicking torch.nn.Linear's uniform(-1/sqrt(in), 1/sqrt(in)).
    kw, kb = jax.random.split(key)
    bound = 1.0 / jnp.sqrt(jnp.asarray(fan_in, dtype))
    w = jax.random.uniform(kw, (fan_out, fan_in), dtype, -bound, bound)
    b = jax.random.uniform(kb, (fan_out,), dtype, -bound, bound)
    return w, b


if __name__ == "__main__":
    key = jax.random.PRNGKey(0)
    k_x, k_adj, k_d, k_s, k_e = jax.random.split(key, 5)

    hidden_dim = 32
    num_nodes = 282     # matches the module's self._num_nodes
    batch = 2

    # Parameters (event_linear exists in __init__ but is unused in forward).
    w_e, b_e = _init_linear_params(k_e, hidden_dim, hidden_dim)  # unused, for parity
    w_d, b_d = _init_linear_params(k_d, hidden_dim, hidden_dim)
    w_s, b_s = _init_linear_params(k_s, hidden_dim, hidden_dim)

    last_output_ab = jax.random.normal(k_x, (batch, num_nodes, hidden_dim), jnp.float32)
    adj = jax.random.normal(k_adj, (num_nodes, num_nodes), jnp.float32)  # unused

    # One-time weight packing.
    w_block, b_block = prepare_event_fc_weights(w_d, b_d, w_s, b_s)

    ev_d, ev_s = event_fc_forward(adj, last_output_ab, w_block, b_block)
    jax.block_until_ready((ev_d, ev_s))

    # Reference check in plain JAX (torch.nn.Linear semantics: x @ W.T + b).
    ref_d = last_output_ab @ w_d.T + b_d
    ref_s = last_output_ab @ w_s.T + b_s
    assert ev_d.shape == (batch, num_nodes, hidden_dim)
    assert ev_s.shape == (batch, num_nodes, hidden_dim)
    assert jnp.allclose(ev_d, ref_d, atol=1e-5, rtol=1e-5)
    assert jnp.allclose(ev_s, ref_s, atol=1e-5, rtol=1e-5)

    print("KERNEL_OK")
</pallas_src>

<mosaic_0001>
module attributes {stable_mosaic.version = 11 : i64} {
  func.func @_event_fc_kernel(%arg0: i32, %arg1: memref<144x128xf32, #tpu.memory_space<vmem>>, %arg2: memref<128x256xf32, #tpu.memory_space<vmem>>, %arg3: memref<1x256xf32, #tpu.memory_space<vmem>>, %arg4: memref<144x128xf32, #tpu.memory_space<vmem>>, %arg5: memref<144x128xf32, #tpu.memory_space<vmem>>) attributes {dimension_semantics = [#tpu.dimension_semantics<parallel>], iteration_bounds = array<i64: 1>, scalar_prefetch = 0 : i64, scratch_operands = 0 : i64, tpu.core_type = #tpu.core_type<tc>, window_params = [{transform_indices = @transform_0, window_bounds = array<i64: 144, 128>}, {pipeline_mode = #tpu.pipeline_mode<synchronous>, transform_indices = @transform_1, window_bounds = array<i64: 128, 256>}, {pipeline_mode = #tpu.pipeline_mode<synchronous>, transform_indices = @transform_2, window_bounds = array<i64: 1, 256>}, {transform_indices = @transform_3, window_bounds = array<i64: 144, 128>}, {transform_indices = @transform_4, window_bounds = array<i64: 144, 128>}]} {
    %c0 = arith.constant 0 : index
    %c0_0 = arith.constant 0 : index
    %0 = vector.load %arg1[%c0, %c0_0] : memref<144x128xf32, #tpu.memory_space<vmem>>, vector<144x128xf32>
    %c0_1 = arith.constant 0 : index
    %c0_2 = arith.constant 0 : index
    %1 = vector.load %arg2[%c0_1, %c0_2] : memref<128x256xf32, #tpu.memory_space<vmem>>, vector<128x256xf32>
    %cst = arith.constant dense<0.000000e+00> : vector<144x256xf32>
    %2 = tpu.matmul %0, %1, %cst {dimension_numbers = #tpu.dot_dimension_numbers<[1], [0], [0], [1], [0, 0, 1, 1], [], []>} : vector<144x128xf32>, vector<128x256xf32>, vector<144x256xf32> -> vector<144x256xf32>
    %c0_3 = arith.constant 0 : index
    %c0_4 = arith.constant 0 : index
    %3 = vector.load %arg3[%c0_3, %c0_4] : memref<1x256xf32, #tpu.memory_space<vmem>>, vector<1x256xf32>
    %4 = vector.broadcast %3 : vector<1x256xf32> to vector<144x256xf32>
    %5 = arith.addf %2, %4 : vector<144x256xf32>
    %6 = vector.extract_strided_slice %5 {offsets = [0, 0], sizes = [144, 128], strides = [1, 1]} : vector<144x256xf32> to vector<144x128xf32>
    %c0_5 = arith.constant 0 : index
    %c0_6 = arith.constant 0 : index
    %7 = vector.load %arg4[%c0_5, %c0_6] : memref<144x128xf32, #tpu.memory_space<vmem>>, vector<144x128xf32>
    tpu.vector_store %arg4[%c0_5, %c0_6], %6 {strides = array<i32>} : memref<144x128xf32, #tpu.memory_space<vmem>>, vector<144x128xf32>,
    %8 = vector.extract_strided_slice %5 {offsets = [0, 128], sizes = [144, 128], strides = [1, 1]} : vector<144x256xf32> to vector<144x128xf32>
    %c0_7 = arith.constant 0 : index
    %c0_8 = arith.constant 0 : index
    %9 = vector.load %arg5[%c0_7, %c0_8] : memref<144x128xf32, #tpu.memory_space<vmem>>, vector<144x128xf32>
    tpu.vector_store %arg5[%c0_7, %c0_8], %8 {strides = array<i32>} : memref<144x128xf32, #tpu.memory_space<vmem>>, vector<144x128xf32>,
    return
  }
  func.func @transform_0(%arg0: i32) -> (i32, i32) {
    %c0_i32 = arith.constant 0 : i32
    %c0_i32_0 = arith.constant 0 : i32
    return %arg0, %c0_i32 : i32, i32
  }
  func.func @transform_1(%arg0: i32) -> (i32, i32) {
    %c0_i32 = arith.constant 0 : i32
    %c0_i32_0 = arith.constant 0 : i32
    %c0_i32_1 = arith.constant 0 : i32
    return %c0_i32, %c0_i32_0 : i32, i32
  }
  func.func @transform_2(%arg0: i32) -> (i32, i32) {
    %c0_i32 = arith.constant 0 : i32
    %c0_i32_0 = arith.constant 0 : i32
    %c0_i32_1 = arith.constant 0 : i32
    return %c0_i32, %c0_i32_0 : i32, i32
  }
  func.func @transform_3(%arg0: i32) -> (i32, i32) {
    %c0_i32 = arith.constant 0 : i32
    %c0_i32_0 = arith.constant 0 : i32
    return %arg0, %c0_i32 : i32, i32
  }
  func.func @transform_4(%arg0: i32) -> (i32, i32) {
    %c0_i32 = arith.constant 0 : i32
    %c0_i32_0 = arith.constant 0 : i32
    return %arg0, %c0_i32 : i32, i32
  }
}

</mosaic_0001>

<llo_original>
// kernel: tpu_custom_call.1
$region0: #{tpu_custom_call.1}
  #allocation0 [shape = 'u32[]', space=smem, size = 0x4, offset = 0x4, fixed_abs, tag = 'smem constant byte address 0x4 - core index']
  #allocation1 [shape = 'u32[144,128]{1,0:T(1,128)}', space=vmem, size = 0x12000, scoped, tag = 'internal scratch']
  %s0 = inlined_call_operand.hbm [shape: f32[144,128], index: 0, kind: input, shape index: {}]
  %s1 = inlined_call_operand.hbm [shape: f32[128,256], index: 1, kind: input, shape index: {}]
  %s2 = inlined_call_operand.vmem [shape: f32[1,256], index: 2, kind: input, shape index: {}]
  %s3 = inlined_call_operand.hbm [shape: f32[144,128], index: 3, kind: output, shape index: {0}]
  %s4 = inlined_call_operand.hbm [shape: f32[144,128], index: 4, kind: output, shape index: {1}]
  %5 = xla_tuple %s3, %s4
  %s6 = sld [smem:[#allocation0]]
  $region38: #{tpu_custom_call.1} parent=0
    _
  %s8 = ssub.s32 1, %s6
  %s9 = scalar_select 0, %s8, %s6
  $region1: #{tpu_custom_call.1} parent=0
    #allocation2 [shape = 'u8[73728]{0}', space=vmem, size = 0x12000, scoped, tag = 'input window, operand 0, single buffered']
    #allocation3 [shape = 's32[1]{0}', space=sflag, size = 0x4, scoped, tag = 'scoped memory for tpu_custom_call.1']
    #allocation4 [shape = 's32[1]{0}', space=sflag, size = 0x4, scoped, tag = 'scoped memory for tpu_custom_call.1']
    #allocation5 [shape = 'u8[131072]{0}', space=vmem, size = 0x20000, scoped, tag = 'input window, operand 1, single buffered']
    #allocation6 [shape = 's32[1]{0}', space=sflag, size = 0x4, scoped, tag = 'scoped memory for tpu_custom_call.1']
    #allocation7 [shape = 'u8[73728]{0}', space=vmem, size = 0x12000, scoped, tag = 'output window, operand 0, single buffered']
    #allocation8 [shape = 'u8[73728]{0}', space=vmem, size = 0x12000, scoped, tag = 'output window, operand 1, single buffered']
    #allocation9 [shape = 's32[1]{0}', space=sflag, size = 0x4, scoped, tag = 'scoped memory for tpu_custom_call.1']
    %10 = vsyncpa [#allocation3], 0
    %11 = vsyncpa [#allocation6], 0
    %12 = vsyncpa [#allocation4], 0
    %13 = vsyncpa [#allocation9], 0
    // Predicated region
    $region2: #{tpu_custom_call.1} parent=1 // pred_check
      _
    $region3: #{tpu_custom_call.1} parent=1 // pred_check_branch
      %15 = sbr.rel (0) target = $region5
    $region4: #{tpu_custom_call.1} parent=1 // pred_region
      %s17 = ssub.s32 2304, 2304
      %18 = vsyncadd [#allocation3], %s17
      %s19 = sshll.u32 [#allocation2], 4
      %s20 = int_to_ptr.vmem [resolvable:$true] %s19
      %25 = dma.hbm_to_vmem [thread:$0]  %s0, 2304, %s20, [#allocation3], 128, 128, 8
    $region5: #{tpu_custom_call.1} parent=1 // pred_fallthru
      _
    // Predicated region
    $region6: #{tpu_custom_call.1} parent=1 // pred_check
      _
    $region7: #{tpu_custom_call.1} parent=1 // pred_check_branch
      %27 = sbr.rel (0) target = $region9
    $region8: #{tpu_custom_call.1} parent=1 // pred_region
      %s29 = ssub.s32 4096, 4096
      %30 = vsyncadd [#allocation6], %s29
      %s31 = sshll.u32 [#allocation5], 4
      %s32 = int_to_ptr.vmem [resolvable:$true] %s31
      %37 = dma.hbm_to_vmem [thread:$0]  %s1, 4096, %s32, [#allocation6], 256, 256, 16
    $region9: #{tpu_custom_call.1} parent=1 // pred_fallthru
      _
    // Predicated region
    $region10: #{tpu_custom_call.1} parent=1 // pred_check
      _
    $region11: #{tpu_custom_call.1} parent=1 // pred_check_branch
      %39 = sbr.rel (0) target = $region13
    $region12: #{tpu_custom_call.1} parent=1 // pred_region
      _
    $region13: #{tpu_custom_call.1} parent=1 // pred_fallthru
      _
    // Predicated region
    $region14: #{tpu_custom_call.1} parent=1 // pred_check
      _
    $region15: #{tpu_custom_call.1} parent=1 // pred_check_branch
      %41 = sbr.rel (0) target = $region17
    $region16: #{tpu_custom_call.1} parent=1 // pred_region
      %42 = dma.done [#allocation3], 2304
    $region17: #{tpu_custom_call.1} parent=1 // pred_fallthru
      _
    // Predicated region
    $region18: #{tpu_custom_call.1} parent=1 // pred_check
      _
    $region19: #{tpu_custom_call.1} parent=1 // pred_check_branch
      %44 = sbr.rel (0) target = $region21
    $region20: #{tpu_custom_call.1} parent=1 // pred_region
      %45 = dma.done [#allocation6], 4096
    $region21: #{tpu_custom_call.1} parent=1 // pred_fallthru
      _
    %v46 = vld [vmem:[#allocation2] sm:$0xff]
    %v47 = vld [vmem:[#allocation2 + $0x8] sm:$0xff]
    %v48 = vld [vmem:[#allocation2 + $0x10] sm:$0xff]
    %v49 = vld [vmem:[#allocation2 + $0x18] sm:$0xff]
    %v50 = vld [vmem:[#allocation2 + $0x20] sm:$0xff]
    %v51 = vld [vmem:[#allocation2 + $0x28] sm:$0xff]
    %v52 = vld [vmem:[#allocation2 + $0x30] sm:$0xff]
    %v53 = vld [vmem:[#allocation2 + $0x38] sm:$0xff]
    %v54 = vld [vmem:[#allocation2 + $0x40] sm:$0xff]
    %v55 = vld [vmem:[#allocation2 + $0x48] sm:$0xff]
    %v56 = vld [vmem:[#allocation2 + $0x50] sm:$0xff]
    %v57 = vld [vmem:[#allocation2 + $0x58] sm:$0xff]
    %v58 = vld [vmem:[#allocation2 + $0x60] sm:$0xff]
    %v59 = vld [vmem:[#allocation2 + $0x68] sm:$0xff]
    %v60 = vld [vmem:[#allocation2 + $0x70] sm:$0xff]
    %v61 = vld [vmem:[#allocation2 + $0x78] sm:$0xff]
    %v62 = vld [vmem:[#allocation2 + $0x80] sm:$0xff]
    %v63 = vld [vmem:[#allocation2 + $0x88] sm:$0xff]
    %v64 = vld [vmem:[#allocation5] sm:$0xff]
    %v65 = vld [vmem:[#allocation5 + $0x8] sm:$0xff]
    %v66 = vld [vmem:[#allocation5 + $0x10] sm:$0xff]
    %v67 = vld [vmem:[#allocation5 + $0x18] sm:$0xff]
    %v68 = vld [vmem:[#allocation5 + $0x20] sm:$0xff]
    %v69 = vld [vmem:[#allocation5 + $0x28] sm:$0xff]
    %v70 = vld [vmem:[#allocation5 + $0x30] sm:$0xff]
    %v71 = vld [vmem:[#allocation5 + $0x38] sm:$0xff]
    %v72 = vld [vmem:[#allocation5 + $0x40] sm:$0xff]
    %v73 = vld [vmem:[#allocation5 + $0x48] sm:$0xff]
    %v74 = vld [vmem:[#allocation5 + $0x50] sm:$0xff]
    %v75 = vld [vmem:[#allocation5 + $0x58] sm:$0xff]
    %v76 = vld [vmem:[#allocation5 + $0x60] sm:$0xff]
    %v77 = vld [vmem:[#allocation5 + $0x68] sm:$0xff]
    %v78 = vld [vmem:[#allocation5 + $0x70] sm:$0xff]
    %v79 = vld [vmem:[#allocation5 + $0x78] sm:$0xff]
    %v80 = vld [vmem:[#allocation5 + $0x80] sm:$0xff]
    %v81 = vld [vmem:[#allocation5 + $0x88] sm:$0xff]
    %v82 = vld [vmem:[#allocation5 + $0x90] sm:$0xff]
    %v83 = vld [vmem:[#allocation5 + $0x98] sm:$0xff]
    %v84 = vld [vmem:[#allocation5 + $0xa0] sm:$0xff]
    %v85 = vld [vmem:[#allocation5 + $0xa8] sm:$0xff]
    %v86 = vld [vmem:[#allocation5 + $0xb0] sm:$0xff]
    %v87 = vld [vmem:[#allocation5 + $0xb8] sm:$0xff]
    %v88 = vld [vmem:[#allocation5 + $0xc0] sm:$0xff]
    %v89 = vld [vmem:[#allocation5 + $0xc8] sm:$0xff]
    %v90 = vld [vmem:[#allocation5 + $0xd0] sm:$0xff]
    %v91 = vld [vmem:[#allocation5 + $0xd8] sm:$0xff]
    %v92 = vld [vmem:[#allocation5 + $0xe0] sm:$0xff]
    %v93 = vld [vmem:[#allocation5 + $0xe8] sm:$0xff]
    %v94 = vld [vmem:[#allocation5 + $0xf0] sm:$0xff]
    %v95 = vld [vmem:[#allocation5 + $0xf8] sm:$0xff]
    %v96 = vld [vmem:[%s2] sm:$0x3]
    %v98 = vlaneseq
    %v99 = vshrl.u32 %v98, 7
    %v100 = vsub.s32 0, %v99
    %v101 = vrot.slane %v96, %v100
    %v102 = vlaneseq
    %v103 = vshrl.u32 %v102, 7
    %v104 = vsub.s32 1, %v103
    %v105 = vrot.slane %v96, %v104
    %108 = vmatprep.subr.mxu0 %v65
    %109 = vmatpush1.msra.mxu0 %v64
    %110 = vmatprep.subr.mxu0 %v67
    %111 = vmatpush1.msra.mxu0 %v66
    %112 = vmatprep.subr.mxu0 %v69
    %113 = vmatpush1.msra.mxu0 %v68
    %114 = vmatprep.subr.mxu0 %v71
    %115 = vmatpush1.msra.mxu0 %v70
    %116 = vmatprep.subr.mxu0 %v73
    %117 = vmatpush1.msra.mxu0 %v72
    %118 = vmatprep.subr.mxu0 %v75
    %119 = vmatpush1.msra.mxu0 %v74
    %120 = vmatprep.subr.mxu0 %v77
    %121 = vmatpush1.msra.mxu0 %v76
    %122 = vmatprep.subr.mxu0 %v79
    %123 = vmatpush1.msra.mxu0 %v78
    %124 = vmatprep.subr.mxu0 %v81
    %125 = vmatpush1.msra.mxu0 %v80
    %126 = vmatprep.subr.mxu0 %v83
    %127 = vmatpush1.msra.mxu0 %v82
    %128 = vmatprep.subr.mxu0 %v85
    %129 = vmatpush1.msra.mxu0 %v84
    %130 = vmatprep.subr.mxu0 %v87
    %131 = vmatpush1.msra.mxu0 %v86
    %132 = vmatprep.subr.mxu0 %v89
    %133 = vmatpush1.msra.mxu0 %v88
    %134 = vmatprep.subr.mxu0 %v91
    %135 = vmatpush1.msra.mxu0 %v90
    %136 = vmatprep.subr.mxu0 %v93
    %137 = vmatpush1.msra.mxu0 %v92
    %138 = vmatprep.subr.mxu0 %v95
    %139 = vmatpush1.msra.mxu0 %v94
    %140 = vmatprep.subr.mxu0 0.0
    %141 = vmatpush1.msra.mxu0 0.0
    %142 = vmatprep.subr.mxu0 0.0
    %143 = vmatpush1.msra.mxu0 0.0
    %144 = vmatprep.subr.mxu0 0.0
    %145 = vmatpush1.msra.mxu0 0.0
    %146 = vmatprep.subr.mxu0 0.0
    %147 = vmatpush1.msra.mxu0 0.0
    %148 = vmatprep.subr.mxu0 0.0
    %149 = vmatpush1.msra.mxu0 0.0
    %150 = vmatprep.subr.mxu0 0.0
    %151 = vmatpush1.msra.mxu0 0.0
    %152 = vmatprep.subr.mxu0 0.0
    %153 = vmatpush1.msra.mxu0 0.0
    %154 = vmatprep.subr.mxu0 0.0
    %155 = vmatpush1.msra.mxu0 0.0
    %156 = vmatprep.subr.mxu0 0.0
    %157 = vmatpush1.msra.mxu0 0.0
    %158 = vmatprep.subr.mxu0 0.0
    %159 = vmatpush1.msra.mxu0 0.0
    %160 = vmatprep.subr.mxu0 0.0
    %161 = vmatpush1.msra.mxu0 0.0
    %162 = vmatprep.subr.mxu0 0.0
    %163 = vmatpush1.msra.mxu0 0.0
    %164 = vmatprep.subr.mxu0 0.0
    %165 = vmatpush1.msra.mxu0 0.0
    %166 = vmatprep.subr.mxu0 0.0
    %167 = vmatpush1.msra.mxu0 0.0
    %168 = vmatprep.subr.mxu0 0.0
    %169 = vmatpush1.msra.mxu0 0.0
    %170 = vmatprep.subr.mxu0 0.0
    %171 = vmatpush1.msra.mxu0 0.0
    %172 = vmatprep.mubr.f32.mxu0 0.0
    %173 = vmatmul.mubr.f32.gmra.mrb[0].mxu0 %v46
    %v174 = vpop.f32.mrb[0].mxu0
    %v175 = vadd.f32 %v101, %v174
    %v176 = vpop.f32.mrb[0].mxu0
    %v177 = vadd.f32 %v105, %v176
    %178 = vmatprep.mubr.f32.mxu0 0.0
    %179 = vmatmul.mubr.f32.gmra.mrb[0].mxu0 %v47
    %v180 = vpop.f32.mrb[0].mxu0
    %v181 = vadd.f32 %v101, %v180
    %v182 = vpop.f32.mrb[0].mxu0
    %v183 = vadd.f32 %v105, %v182
    %184 = vmatprep.mubr.f32.mxu0 0.0
    %185 = vmatmul.mubr.f32.gmra.mrb[0].mxu0 %v48
    %v186 = vpop.f32.mrb[0].mxu0
    %v187 = vadd.f32 %v101, %v186
    %v188 = vpop.f32.mrb[0].mxu0
    %v189 = vadd.f32 %v105, %v188
    %190 = vmatprep.mubr.f32.mxu0 0.0
    %191 = vmatmul.mubr.f32.gmra.mrb[0].mxu0 %v49
    %v192 = vpop.f32.mrb[0].mxu0
    %v193 = vadd.f32 %v101, %v192
    %v194 = vpop.f32.mrb[0].mxu0
    %v195 = vadd.f32 %v105, %v194
    %196 = vmatprep.mubr.f32.mxu0 0.0
    %197 = vmatmul.mubr.f32.gmra.mrb[0].mxu0 %v50
    %v198 = vpop.f32.mrb[0].mxu0
    %v199 = vadd.f32 %v101, %v198
    %v200 = vpop.f32.mrb[0].mxu0
    %v201 = vadd.f32 %v105, %v200
    %202 = vmatprep.mubr.f32.mxu0 0.0
    %203 = vmatmul.mubr.f32.gmra.mrb[0].mxu0 %v51
    %v204 = vpop.f32.mrb[0].mxu0
    %v205 = vadd.f32 %v101, %v204
    %v206 = vpop.f32.mrb[0].mxu0
    %v207 = vadd.f32 %v105, %v206
    %208 = vmatprep.mubr.f32.mxu0 0.0
    %209 = vmatmul.mubr.f32.gmra.mrb[0].mxu0 %v52
    %v210 = vpop.f32.mrb[0].mxu0
    %v211 = vadd.f32 %v101, %v210
    %v212 = vpop.f32.mrb[0].mxu0
    %v213 = vadd.f32 %v105, %v212
    %214 = vmatprep.mubr.f32.mxu0 0.0
    %215 = vmatmul.mubr.f32.gmra.mrb[0].mxu0 %v53
    %v216 = vpop.f32.mrb[0].mxu0
    %v217 = vadd.f32 %v101, %v216
    %v218 = vpop.f32.mrb[0].mxu0
    %v219 = vadd.f32 %v105, %v218
    %220 = vmatprep.mubr.f32.mxu0 0.0
    %221 = vmatmul.mubr.f32.gmra.mrb[0].mxu0 %v54
    %v222 = vpop.f32.mrb[0].mxu0
    %v223 = vadd.f32 %v101, %v222
    %v224 = vpop.f32.mrb[0].mxu0
    %v225 = vadd.f32 %v105, %v224
    %226 = vmatprep.mubr.f32.mxu0 0.0
    %227 = vmatmul.mubr.f32.gmra.mrb[0].mxu0 %v55
    %v228 = vpop.f32.mrb[0].mxu0
    %v229 = vadd.f32 %v101, %v228
    %v230 = vpop.f32.mrb[0].mxu0
    %v231 = vadd.f32 %v105, %v230
    %232 = vmatprep.mubr.f32.mxu0 0.0
    %233 = vmatmul.mubr.f32.gmra.mrb[0].mxu0 %v56
    %v234 = vpop.f32.mrb[0].mxu0
    %v235 = vadd.f32 %v101, %v234
    %v236 = vpop.f32.mrb[0].mxu0
    %v237 = vadd.f32 %v105, %v236
    %238 = vmatprep.mubr.f32.mxu0 0.0
    %239 = vmatmul.mubr.f32.gmra.mrb[0].mxu0 %v57
    %v240 = vpop.f32.mrb[0].mxu0
    %v241 = vadd.f32 %v101, %v240
    %v242 = vpop.f32.mrb[0].mxu0
    %v243 = vadd.f32 %v105, %v242
    %244 = vmatprep.mubr.f32.mxu0 0.0
    %245 = vmatmul.mubr.f32.gmra.mrb[0].mxu0 %v58
    %v246 = vpop.f32.mrb[0].mxu0
    %v247 = vadd.f32 %v101, %v246
    %v248 = vpop.f32.mrb[0].mxu0
    %v249 = vadd.f32 %v105, %v248
    %250 = vmatprep.mubr.f32.mxu0 0.0
    %251 = vmatmul.mubr.f32.gmra.mrb[0].mxu0 %v59
    %v252 = vpop.f32.mrb[0].mxu0
    %v253 = vadd.f32 %v101, %v252
    %v254 = vpop.f32.mrb[0].mxu0
    %v255 = vadd.f32 %v105, %v254
    %256 = vmatprep.mubr.f32.mxu0 0.0
    %257 = vmatmul.mubr.f32.gmra.mrb[0].mxu0 %v60
    %v258 = vpop.f32.mrb[0].mxu0
    %v259 = vadd.f32 %v101, %v258
    %v260 = vpop.f32.mrb[0].mxu0
    %v261 = vadd.f32 %v105, %v260
    %262 = vmatprep.mubr.f32.mxu0 0.0
    %263 = vmatmul.mubr.f32.gmra.mrb[0].mxu0 %v61
    %v264 = vpop.f32.mrb[0].mxu0
    %v265 = vadd.f32 %v101, %v264
    %v266 = vpop.f32.mrb[0].mxu0
    %v267 = vadd.f32 %v105, %v266
    %268 = vmatprep.mubr.f32.mxu0 0.0
    %269 = vmatmul.mubr.f32.gmra.mrb[0].mxu0 %v62
    %v270 = vpop.f32.mrb[0].mxu0
    %v271 = vadd.f32 %v101, %v270
    %v272 = vpop.f32.mrb[0].mxu0
    %v273 = vadd.f32 %v105, %v272
    %274 = vmatprep.mubr.f32.mxu0 0.0
    %275 = vmatmul.mubr.f32.gmra.mrb[0].mxu0 %v63
    %v276 = vpop.f32.mrb[0].mxu0
    %v277 = vadd.f32 %v101, %v276
    %v278 = vpop.f32.mrb[0].mxu0
    %v279 = vadd.f32 %v105, %v278
    %280 = vdwg.mxu0
    %281 = vst [vmem:[#allocation7] sm:$0xff] %v175
    %282 = vst [vmem:[#allocation7 + $0x8] sm:$0xff] %v181
    %283 = vst [vmem:[#allocation7 + $0x10] sm:$0xff] %v187
    %284 = vst [vmem:[#allocation7 + $0x18] sm:$0xff] %v193
    %285 = vst [vmem:[#allocation7 + $0x20] sm:$0xff] %v199
    %286 = vst [vmem:[#allocation7 + $0x28] sm:$0xff] %v205
    %287 = vst [vmem:[#allocation7 + $0x30] sm:$0xff] %v211
    %288 = vst [vmem:[#allocation7 + $0x38] sm:$0xff] %v217
    %289 = vst [vmem:[#allocation7 + $0x40] sm:$0xff] %v223
    %290 = vst [vmem:[#allocation7 + $0x48] sm:$0xff] %v229
    %291 = vst [vmem:[#allocation7 + $0x50] sm:$0xff] %v235
    %292 = vst [vmem:[#allocation7 + $0x58] sm:$0xff] %v241
    %293 = vst [vmem:[#allocation7 + $0x60] sm:$0xff] %v247
    %294 = vst [vmem:[#allocation7 + $0x68] sm:$0xff] %v253
    %295 = vst [vmem:[#allocation7 + $0x70] sm:$0xff] %v259
    %296 = vst [vmem:[#allocation7 + $0x78] sm:$0xff] %v265
    %297 = vst [vmem:[#allocation7 + $0x80] sm:$0xff] %v271
    %298 = vst [vmem:[#allocation7 + $0x88] sm:$0xff] %v277
    %299 = vst [vmem:[#allocation8] sm:$0xff] %v177
    %300 = vst [vmem:[#allocation8 + $0x8] sm:$0xff] %v183
    %301 = vst [vmem:[#allocation8 + $0x10] sm:$0xff] %v189
    %302 = vst [vmem:[#allocation8 + $0x18] sm:$0xff] %v195
    %303 = vst [vmem:[#allocation8 + $0x20] sm:$0xff] %v201
    %304 = vst [vmem:[#allocation8 + $0x28] sm:$0xff] %v207
    %305 = vst [vmem:[#allocation8 + $0x30] sm:$0xff] %v213
    %306 = vst [vmem:[#allocation8 + $0x38] sm:$0xff] %v219
    %307 = vst [vmem:[#allocation8 + $0x40] sm:$0xff] %v225
    %308 = vst [vmem:[#allocation8 + $0x48] sm:$0xff] %v231
    %309 = vst [vmem:[#allocation8 + $0x50] sm:$0xff] %v237
    %310 = vst [vmem:[#allocation8 + $0x58] sm:$0xff] %v243
    %311 = vst [vmem:[#allocation8 + $0x60] sm:$0xff] %v249
    %312 = vst [vmem:[#allocation8 + $0x68] sm:$0xff] %v255
    %313 = vst [vmem:[#allocation8 + $0x70] sm:$0xff] %v261
    %314 = vst [vmem:[#allocation8 + $0x78] sm:$0xff] %v267
    %315 = vst [vmem:[#allocation8 + $0x80] sm:$0xff] %v273
    %316 = vst [vmem:[#allocation8 + $0x88] sm:$0xff] %v279
    // Predicated region
    $region22: #{tpu_custom_call.1} parent=1 // pred_check
      _
    $region23: #{tpu_custom_call.1} parent=1 // pred_check_branch
      %318 = sbr.rel (0) target = $region25
    $region24: #{tpu_custom_call.1} parent=1 // pred_region
      %s320 = ssub.s32 2304, 2304
      %321 = vsyncadd [#allocation4], %s320
      %s322 = sshll.u32 [#allocation7], 4
      %s323 = int_to_ptr.vmem [resolvable:$true] %s322
      %328 = dma.vmem_to_hbm [thread:$0]  %s323, 2304, %s3, [#allocation4], 128, 128, 8
    $region25: #{tpu_custom_call.1} parent=1 // pred_fallthru
      _
    // Predicated region
    $region26: #{tpu_custom_call.1} parent=1 // pred_check
      _
    $region27: #{tpu_custom_call.1} parent=1 // pred_check_branch
      %330 = sbr.rel (0) target = $region29
    $region28: #{tpu_custom_call.1} parent=1 // pred_region
      %s332 = ssub.s32 2304, 2304
      %333 = vsyncadd [#allocation9], %s332
      %s334 = sshll.u32 [#allocation8], 4
      %s335 = int_to_ptr.vmem [resolvable:$true] %s334
      %340 = dma.vmem_to_hbm [thread:$0]  %s335, 2304, %s4, [#allocation9], 128, 128, 8
    $region29: #{tpu_custom_call.1} parent=1 // pred_fallthru
      _
    // Predicated region
    $region30: #{tpu_custom_call.1} parent=1 // pred_check
      _
    $region31: #{tpu_custom_call.1} parent=1 // pred_check_branch
      %342 = sbr.rel (0) target = $region33
    $region32: #{tpu_custom_call.1} parent=1 // pred_region
      %343 = dma.done [#allocation4], 2304
    $region33: #{tpu_custom_call.1} parent=1 // pred_fallthru
      _
    // Predicated region
    $region34: #{tpu_custom_call.1} parent=1 // pred_check
      _
    $region35: #{tpu_custom_call.1} parent=1 // pred_check_branch
      %345 = sbr.rel (0) target = $region37
    $region36: #{tpu_custom_call.1} parent=1 // pred_region
      %346 = dma.done [#allocation9], 2304
    $region37: #{tpu_custom_call.1} parent=1 // pred_fallthru
      _
    %347 = vsyncpa [#allocation3], 1
    %348 = vsyncpa [#allocation6], 1
    %349 = vsyncpa [#allocation4], 1
    %350 = vsyncpa [#allocation9], 1

</llo_original>
